<compile_context>
chip_gen: v7x
topology: tpu7x:2x2x1
jax: 0.10.0
libtpu: 0.0.40
codegen_flags: <defaults>
</compile_context>

<pallas_src>
import functools

import jax
import jax.numpy as jnp
from jax.experimental import pallas as pl
from jax.experimental.pallas import tpu as pltpu

_LANE = 128
_SUBLANE = 8
_VMEM = pl.BlockSpec(memory_space=pltpu.MemorySpace.VMEM)


def _round_up(n, m):
    return (n + m - 1) // m * m


def _layernorm(x, gamma, beta, eps=1e-5):
    mu = jnp.mean(x, axis=-1, keepdims=True)
    var = jnp.mean(jnp.square(x - mu), axis=-1, keepdims=True)
    return (x - mu) * jax.lax.rsqrt(var + eps) * gamma + beta


# ----------------------------------------------------------------------------- kernel

def _vit_fused_kernel(x_ref, slab_ref, o_ref, *, layout, num_blocks):
    """Fused forward.  `layout` maps name -> (row_offset, nrows, ncols) into the
    packed parameter slab; all slices are static (zero runtime cost)."""

    def ld(name):
        r0, nr, nc = layout[name]
        return slab_ref[r0:r0 + nr, 0:nc]

    # embedding: (N, D_in) @ (D_in, E) + (1, E)
    h = (jnp.dot(x_ref[...], ld("we"), preferred_element_type=jnp.float32)
         + ld("be"))

    for b in range(num_blocks):  # statically unrolled over transformer blocks
        p = lambda n, b=b: ld(f"blk{b}_{n}")

        # Attention with S == 1: softmax over one key == 1.0.  V-proj, fc_out
        # and the residual are all folded into a single (E, E) matrix.
        x1 = _layernorm(
            jnp.dot(h, p("wattn"), preferred_element_type=jnp.float32) + p("bo"),
            p("g1"), p("t1"))

        # feed-forward: Linear -> ReLU -> Linear (dropout == identity)
        hid = jnp.maximum(
            jnp.dot(x1, p("w1"), preferred_element_type=jnp.float32) + p("b1"),
            0.0)
        ff = jnp.dot(hid, p("w2"), preferred_element_type=jnp.float32) + p("b2")

        # residual + LayerNorm 2
        h = _layernorm(ff + x1, p("g2"), p("t2"))

    # mean over seq (size 1) is identity; classifier weight is pre-padded to
    # 128 lanes -> lane-dense final store.
    o_ref[...] = (jnp.dot(h, ld("wf"), preferred_element_type=jnp.float32)
                  + ld("bf"))


# ----------------------------------------------------------------------------- one-time param prep

def prepare_params(params, *, num_heads):
    """One-time host-side prep (outside the per-call path): fold the attention
    value/output projections + residual, transpose all weights to
    (in, out) layout, and pack everything into a single (rows, 128) slab."""
    (we, be), blocks, (wf, bf) = params
    embed_size = we.shape[0]
    num_classes = wf.shape[0]
    eye_e = jnp.eye(embed_size, dtype=jnp.float32)
    eye_h = jnp.eye(num_heads, dtype=jnp.float32)

    entries = [("we", we.T), ("be", be.reshape(1, -1))]
    for i, (wq, wk, wv, wo, bo, w1, b1, w2, b2, g1, t1, g2, t2) in enumerate(blocks):
        del wq, wk  # unused: with S == 1 the output does not depend on Q/K
        # block_diag(Wv^T) @ Wo^T + I : V-proj + fc_out + residual in one matmul
        wattn = jnp.kron(eye_h, wv.T) @ wo.T + eye_e
        entries += [
            (f"blk{i}_wattn", wattn),
            (f"blk{i}_bo", bo.reshape(1, -1)),
            (f"blk{i}_w1", w1.T),
            (f"blk{i}_b1", b1.reshape(1, -1)),
            (f"blk{i}_w2", w2.T),
            (f"blk{i}_b2", b2.reshape(1, -1)),
            (f"blk{i}_g1", g1.reshape(1, -1)),
            (f"blk{i}_t1", t1.reshape(1, -1)),
            (f"blk{i}_g2", g2.reshape(1, -1)),
            (f"blk{i}_t2", t2.reshape(1, -1)),
        ]
    # classifier: pad output columns to 128 lanes for an unmasked lane-dense store
    wf_pad = jnp.zeros((embed_size, _LANE), jnp.float32).at[:, :num_classes].set(wf.T)
    bf_pad = jnp.zeros((1, _LANE), jnp.float32).at[:, :num_classes].set(
        bf.reshape(1, -1))
    entries += [("wf", wf_pad), ("bf", bf_pad)]

    layout = {}
    pieces = []
    row = 0
    for name, arr in entries:
        arr = jnp.asarray(arr, jnp.float32)
        nr, nc = arr.shape
        assert nc <= _LANE
        layout[name] = (row, nr, nc)
        nr_pad = _round_up(nr, _SUBLANE)  # keep every segment sublane-aligned
        piece = jnp.zeros((nr_pad, _LANE), jnp.float32).at[:nr, :nc].set(arr)
        pieces.append(piece)
        row += nr_pad
    slab = jnp.concatenate(pieces, axis=0)

    meta = dict(layout=layout,
                num_blocks=len(blocks),
                num_classes=num_classes,
                embed_size=embed_size,
                ff_hidden=blocks[0][5].shape[0] if blocks else 0)
    return slab, meta


# ----------------------------------------------------------------------------- wrapper

def vit_forward(x, slab, meta):
    assert x.ndim == 2, "forward expects (N, input_size); seq_len is fixed to 1"
    n, d_in = x.shape
    e = meta["embed_size"]
    ff = meta["ff_hidden"]
    nb = meta["num_blocks"]
    ncls = meta["num_classes"]

    flops = (2 * n * d_in * e
             + nb * (2 * n * e * e + 4 * n * e * ff)
             + 2 * n * e * _LANE)
    bytes_accessed = (x.size + slab.size + n * _LANE) * 4

    kernel = functools.partial(_vit_fused_kernel,
                               layout=meta["layout"], num_blocks=nb)
    out = pl.pallas_call(
        kernel,
        out_shape=jax.ShapeDtypeStruct((n, _LANE), jnp.float32),
        in_specs=[_VMEM, _VMEM],
        out_specs=_VMEM,
        cost_estimate=pl.CostEstimate(flops=flops,
                                      transcendentals=2 * nb * n,
                                      bytes_accessed=bytes_accessed),
    )(x, slab)
    return out[:, :ncls]


# ----------------------------------------------------------------------------- pure-JAX reference

def vit_reference(x, params, *, num_heads):
    """Faithful port of the PyTorch forward (mask=None, eval mode)."""
    (we, be), blocks, (wf, bf) = params
    h = x @ we.T + be                      # (N, E)
    h = h[:, None, :]                      # (N, 1, E) == x.unsqueeze(1)
    n, s, e = h.shape
    hd = e // num_heads
    for (wq, wk, wv, wo, bo, w1, b1, w2, b2, g1, t1, g2, t2) in blocks:
        xr = h.reshape(n, s, num_heads, hd)
        q = xr @ wq.T
        k = xr @ wk.T
        v = xr @ wv.T
        energy = jnp.einsum('nqhd,nkhd->nhqk', q, k)
        att = jax.nn.softmax(energy / jnp.sqrt(jnp.float32(e)), axis=3)
        out = jnp.einsum('nhql,nlhd->nqhd', att, v).reshape(n, s, e)
        out = out @ wo.T + bo
        x1 = _layernorm(out + h, g1, t1)
        ffo = jnp.maximum(x1 @ w1.T + b1, 0.0) @ w2.T + b2
        h = _layernorm(ffo + x1, g2, t2)
    h = h.mean(axis=1)
    return h @ wf.T + bf


# ----------------------------------------------------------------------------- params

def init_params(key, *, input_size, num_classes, embed_size, num_heads,
                num_blocks, ff_hidden):
    hd = embed_size // num_heads
    keys = jax.random.split(key, 2 + num_blocks)

    def rnd(k, shape, scale):
        return scale * jax.random.normal(k, shape, jnp.float32)

    ke = jax.random.split(keys[0], 2)
    embed = (rnd(ke[0], (embed_size, input_size), 0.05),
             rnd(ke[1], (1, embed_size), 0.05))

    blocks = []
    for b in range(num_blocks):
        kb = jax.random.split(keys[1 + b], 9)
        wq = rnd(kb[0], (hd, hd), 0.1)
        wk = rnd(kb[1], (hd, hd), 0.1)
        wv = rnd(kb[2], (hd, hd), 0.1)
        wo = rnd(kb[3], (embed_size, embed_size), 0.05)
        bo = rnd(kb[4], (1, embed_size), 0.05)
        w1 = rnd(kb[5], (ff_hidden, embed_size), 0.05)
        b1 = rnd(kb[6], (1, ff_hidden), 0.05)
        w2 = rnd(kb[7], (embed_size, ff_hidden), 0.05)
        b2 = rnd(kb[8], (1, embed_size), 0.05)
        g1 = jnp.ones((1, embed_size), jnp.float32)
        t1 = jnp.zeros((1, embed_size), jnp.float32)
        g2 = jnp.ones((1, embed_size), jnp.float32)
        t2 = jnp.zeros((1, embed_size), jnp.float32)
        blocks.append((wq, wk, wv, wo, bo, w1, b1, w2, b2, g1, t1, g2, t2))

    kf = jax.random.split(keys[-1], 2)
    fc = (rnd(kf[0], (num_classes, embed_size), 0.05),
          rnd(kf[1], (1, num_classes), 0.05))
    return embed, blocks, fc


# ----------------------------------------------------------------------------- main

if __name__ == "__main__":
    N = 4
    INPUT_SIZE = 16
    NUM_CLASSES = 5
    EMBED_SIZE = 32
    NUM_HEADS = 4
    NUM_BLOCKS = 2
    FF_HIDDEN = 64

    key = jax.random.PRNGKey(0)
    kx, kp = jax.random.split(key)
    x = jax.random.normal(kx, (N, INPUT_SIZE), jnp.float32)
    params = init_params(
        kp,
        input_size=INPUT_SIZE, num_classes=NUM_CLASSES, embed_size=EMBED_SIZE,
        num_heads=NUM_HEADS, num_blocks=NUM_BLOCKS, ff_hidden=FF_HIDDEN,
    )

    # One-time parameter preparation (fold + transpose + pack), off the hot path.
    slab, meta = prepare_params(params, num_heads=NUM_HEADS)
    slab = jax.block_until_ready(slab)

    fwd = jax.jit(lambda x_, slab_: vit_forward(x_, slab_, meta))
    out = jax.block_until_ready(fwd(x, slab))

    ref = vit_reference(x, params, num_heads=NUM_HEADS)
    assert out.shape == (N, NUM_CLASSES), out.shape
    assert bool(jnp.all(jnp.isfinite(out)))
    max_err = float(jnp.max(jnp.abs(out - ref)))
    assert max_err < 1e-3, max_err
    print("KERNEL_OK")
</pallas_src>

<mosaic_0001>
module attributes {stable_mosaic.version = 11 : i64} {
  func.func @_vit_fused_kernel(%arg0: memref<4x16xf32, #tpu.memory_space<vmem>>, %arg1: memref<432x128xf32, #tpu.memory_space<vmem>>, %arg2: memref<4x128xf32, #tpu.memory_space<vmem>>) attributes {dimension_semantics = [], scalar_prefetch = 0 : i64, scratch_operands = 0 : i64, tpu.core_type = #tpu.core_type<tc>} {
    %c0 = arith.constant 0 : index
    %c0_0 = arith.constant 0 : index
    %0 = vector.load %arg0[%c0, %c0_0] : memref<4x16xf32, #tpu.memory_space<vmem>>, vector<4x16xf32>
    %c0_1 = arith.constant 0 : index
    %c0_2 = arith.constant 0 : index
    %1 = vector.load %arg1[%c0_1, %c0_2] : memref<432x128xf32, #tpu.memory_space<vmem>>, vector<16x32xf32>
    %cst = arith.constant dense<0.000000e+00> : vector<4x32xf32>
    %2 = tpu.matmul %0, %1, %cst {dimension_numbers = #tpu.dot_dimension_numbers<[1], [0], [0], [1], [0, 0, 1, 1], [], []>} : vector<4x16xf32>, vector<16x32xf32>, vector<4x32xf32> -> vector<4x32xf32>
    %c16 = arith.constant 16 : index
    %c0_3 = arith.constant 0 : index
    %3 = vector.load %arg1[%c16, %c0_3] : memref<432x128xf32, #tpu.memory_space<vmem>>, vector<1x32xf32>
    %4 = vector.broadcast %3 : vector<1x32xf32> to vector<4x32xf32>
    %5 = arith.addf %2, %4 : vector<4x32xf32>
    %c24 = arith.constant 24 : index
    %c0_4 = arith.constant 0 : index
    %6 = vector.load %arg1[%c24, %c0_4] : memref<432x128xf32, #tpu.memory_space<vmem>>, vector<32x32xf32>
    %cst_5 = arith.constant dense<0.000000e+00> : vector<4x32xf32>
    %7 = tpu.matmul %5, %6, %cst_5 {dimension_numbers = #tpu.dot_dimension_numbers<[1], [0], [0], [1], [0, 0, 1, 1], [], []>} : vector<4x32xf32>, vector<32x32xf32>, vector<4x32xf32> -> vector<4x32xf32>
    %c56 = arith.constant 56 : index
    %c0_6 = arith.constant 0 : index
    %8 = vector.load %arg1[%c56, %c0_6] : memref<432x128xf32, #tpu.memory_space<vmem>>, vector<1x32xf32>
    %9 = vector.broadcast %8 : vector<1x32xf32> to vector<4x32xf32>
    %10 = arith.addf %7, %9 : vector<4x32xf32>
    %c176 = arith.constant 176 : index
    %c0_7 = arith.constant 0 : index
    %11 = vector.load %arg1[%c176, %c0_7] : memref<432x128xf32, #tpu.memory_space<vmem>>, vector<1x32xf32>
    %c184 = arith.constant 184 : index
    %c0_8 = arith.constant 0 : index
    %12 = vector.load %arg1[%c184, %c0_8] : memref<432x128xf32, #tpu.memory_space<vmem>>, vector<1x32xf32>
    %cst_9 = arith.constant dense<0.000000e+00> : vector<4xf32>
    %13 = vector.multi_reduction <add>, %10, %cst_9 [1] : vector<4x32xf32> to vector<4xf32>
    %14 = vector.shape_cast %13 : vector<4xf32> to vector<4x1xf32>
    %cst_10 = arith.constant 3.200000e+01 : f32
    %15 = vector.broadcast %cst_10 : f32 to vector<4x1xf32>
    %16 = arith.divf %14, %15 : vector<4x1xf32>
    %17 = vector.broadcast %16 : vector<4x1xf32> to vector<4x32xf32>
    %18 = arith.subf %10, %17 : vector<4x32xf32>
    %19 = arith.mulf %18, %18 : vector<4x32xf32>
    %cst_11 = arith.constant dense<0.000000e+00> : vector<4xf32>
    %20 = vector.multi_reduction <add>, %19, %cst_11 [1] : vector<4x32xf32> to vector<4xf32>
    %21 = vector.shape_cast %20 : vector<4xf32> to vector<4x1xf32>
    %cst_12 = arith.constant 3.200000e+01 : f32
    %22 = vector.broadcast %cst_12 : f32 to vector<4x1xf32>
    %23 = arith.divf %21, %22 : vector<4x1xf32>
    %24 = vector.broadcast %16 : vector<4x1xf32> to vector<4x32xf32>
    %25 = arith.subf %10, %24 : vector<4x32xf32>
    %cst_13 = arith.constant 9.99999974E-6 : f32
    %26 = vector.broadcast %cst_13 : f32 to vector<4x1xf32>
    %27 = arith.addf %23, %26 : vector<4x1xf32>
    %28 = math.rsqrt %27 : vector<4x1xf32>
    %29 = vector.broadcast %28 : vector<4x1xf32> to vector<4x32xf32>
    %30 = arith.mulf %25, %29 : vector<4x32xf32>
    %31 = vector.broadcast %11 : vector<1x32xf32> to vector<4x32xf32>
    %32 = arith.mulf %30, %31 : vector<4x32xf32>
    %33 = vector.broadcast %12 : vector<1x32xf32> to vector<4x32xf32>
    %34 = arith.addf %32, %33 : vector<4x32xf32>
    %c64 = arith.constant 64 : index
    %c0_14 = arith.constant 0 : index
    %35 = vector.load %arg1[%c64, %c0_14] : memref<432x128xf32, #tpu.memory_space<vmem>>, vector<32x64xf32>
    %cst_15 = arith.constant dense<0.000000e+00> : vector<4x64xf32>
    %36 = tpu.matmul %34, %35, %cst_15 {dimension_numbers = #tpu.dot_dimension_numbers<[1], [0], [0], [1], [0, 0, 1, 1], [], []>} : vector<4x32xf32>, vector<32x64xf32>, vector<4x64xf32> -> vector<4x64xf32>
    %c96 = arith.constant 96 : index
    %c0_16 = arith.constant 0 : index
    %37 = vector.load %arg1[%c96, %c0_16] : memref<432x128xf32, #tpu.memory_space<vmem>>, vector<1x64xf32>
    %38 = vector.broadcast %37 : vector<1x64xf32> to vector<4x64xf32>
    %39 = arith.addf %36, %38 : vector<4x64xf32>
    %cst_17 = arith.constant 0.000000e+00 : f32
    %40 = vector.broadcast %cst_17 : f32 to vector<4x64xf32>
    %41 = arith.maximumf %39, %40 : vector<4x64xf32>
    %c104 = arith.constant 104 : index
    %c0_18 = arith.constant 0 : index
    %42 = vector.load %arg1[%c104, %c0_18] : memref<432x128xf32, #tpu.memory_space<vmem>>, vector<64x32xf32>
    %cst_19 = arith.constant dense<0.000000e+00> : vector<4x32xf32>
    %43 = tpu.matmul %41, %42, %cst_19 {dimension_numbers = #tpu.dot_dimension_numbers<[1], [0], [0], [1], [0, 0, 1, 1], [], []>} : vector<4x64xf32>, vector<64x32xf32>, vector<4x32xf32> -> vector<4x32xf32>
    %c168 = arith.constant 168 : index
    %c0_20 = arith.constant 0 : index
    %44 = vector.load %arg1[%c168, %c0_20] : memref<432x128xf32, #tpu.memory_space<vmem>>, vector<1x32xf32>
    %45 = vector.broadcast %44 : vector<1x32xf32> to vector<4x32xf32>
    %46 = arith.addf %43, %45 : vector<4x32xf32>
    %47 = arith.addf %46, %34 : vector<4x32xf32>
    %c192 = arith.constant 192 : index
    %c0_21 = arith.constant 0 : index
    %48 = vector.load %arg1[%c192, %c0_21] : memref<432x128xf32, #tpu.memory_space<vmem>>, vector<1x32xf32>
    %c200 = arith.constant 200 : index
    %c0_22 = arith.constant 0 : index
    %49 = vector.load %arg1[%c200, %c0_22] : memref<432x128xf32, #tpu.memory_space<vmem>>, vector<1x32xf32>
    %cst_23 = arith.constant dense<0.000000e+00> : vector<4xf32>
    %50 = vector.multi_reduction <add>, %47, %cst_23 [1] : vector<4x32xf32> to vector<4xf32>
    %51 = vector.shape_cast %50 : vector<4xf32> to vector<4x1xf32>
    %cst_24 = arith.constant 3.200000e+01 : f32
    %52 = vector.broadcast %cst_24 : f32 to vector<4x1xf32>
    %53 = arith.divf %51, %52 : vector<4x1xf32>
    %54 = vector.broadcast %53 : vector<4x1xf32> to vector<4x32xf32>
    %55 = arith.subf %47, %54 : vector<4x32xf32>
    %56 = arith.mulf %55, %55 : vector<4x32xf32>
    %cst_25 = arith.constant dense<0.000000e+00> : vector<4xf32>
    %57 = vector.multi_reduction <add>, %56, %cst_25 [1] : vector<4x32xf32> to vector<4xf32>
    %58 = vector.shape_cast %57 : vector<4xf32> to vector<4x1xf32>
    %cst_26 = arith.constant 3.200000e+01 : f32
    %59 = vector.broadcast %cst_26 : f32 to vector<4x1xf32>
    %60 = arith.divf %58, %59 : vector<4x1xf32>
    %61 = vector.broadcast %53 : vector<4x1xf32> to vector<4x32xf32>
    %62 = arith.subf %47, %61 : vector<4x32xf32>
    %cst_27 = arith.constant 9.99999974E-6 : f32
    %63 = vector.broadcast %cst_27 : f32 to vector<4x1xf32>
    %64 = arith.addf %60, %63 : vector<4x1xf32>
    %65 = math.rsqrt %64 : vector<4x1xf32>
    %66 = vector.broadcast %65 : vector<4x1xf32> to vector<4x32xf32>
    %67 = arith.mulf %62, %66 : vector<4x32xf32>
    %68 = vector.broadcast %48 : vector<1x32xf32> to vector<4x32xf32>
    %69 = arith.mulf %67, %68 : vector<4x32xf32>
    %70 = vector.broadcast %49 : vector<1x32xf32> to vector<4x32xf32>
    %71 = arith.addf %69, %70 : vector<4x32xf32>
    %c208 = arith.constant 208 : index
    %c0_28 = arith.constant 0 : index
    %72 = vector.load %arg1[%c208, %c0_28] : memref<432x128xf32, #tpu.memory_space<vmem>>, vector<32x32xf32>
    %cst_29 = arith.constant dense<0.000000e+00> : vector<4x32xf32>
    %73 = tpu.matmul %71, %72, %cst_29 {dimension_numbers = #tpu.dot_dimension_numbers<[1], [0], [0], [1], [0, 0, 1, 1], [], []>} : vector<4x32xf32>, vector<32x32xf32>, vector<4x32xf32> -> vector<4x32xf32>
    %c240 = arith.constant 240 : index
    %c0_30 = arith.constant 0 : index
    %74 = vector.load %arg1[%c240, %c0_30] : memref<432x128xf32, #tpu.memory_space<vmem>>, vector<1x32xf32>
    %75 = vector.broadcast %74 : vector<1x32xf32> to vector<4x32xf32>
    %76 = arith.addf %73, %75 : vector<4x32xf32>
    %c360 = arith.constant 360 : index
    %c0_31 = arith.constant 0 : index
    %77 = vector.load %arg1[%c360, %c0_31] : memref<432x128xf32, #tpu.memory_space<vmem>>, vector<1x32xf32>
    %c368 = arith.constant 368 : index
    %c0_32 = arith.constant 0 : index
    %78 = vector.load %arg1[%c368, %c0_32] : memref<432x128xf32, #tpu.memory_space<vmem>>, vector<1x32xf32>
    %cst_33 = arith.constant dense<0.000000e+00> : vector<4xf32>
    %79 = vector.multi_reduction <add>, %76, %cst_33 [1] : vector<4x32xf32> to vector<4xf32>
    %80 = vector.shape_cast %79 : vector<4xf32> to vector<4x1xf32>
    %cst_34 = arith.constant 3.200000e+01 : f32
    %81 = vector.broadcast %cst_34 : f32 to vector<4x1xf32>
    %82 = arith.divf %80, %81 : vector<4x1xf32>
    %83 = vector.broadcast %82 : vector<4x1xf32> to vector<4x32xf32>
    %84 = arith.subf %76, %83 : vector<4x32xf32>
    %85 = arith.mulf %84, %84 : vector<4x32xf32>
    %cst_35 = arith.constant dense<0.000000e+00> : vector<4xf32>
    %86 = vector.multi_reduction <add>, %85, %cst_35 [1] : vector<4x32xf32> to vector<4xf32>
    %87 = vector.shape_cast %86 : vector<4xf32> to vector<4x1xf32>
    %cst_36 = arith.constant 3.200000e+01 : f32
    %88 = vector.broadcast %cst_36 : f32 to vector<4x1xf32>
    %89 = arith.divf %87, %88 : vector<4x1xf32>
    %90 = vector.broadcast %82 : vector<4x1xf32> to vector<4x32xf32>
    %91 = arith.subf %76, %90 : vector<4x32xf32>
    %cst_37 = arith.constant 9.99999974E-6 : f32
    %92 = vector.broadcast %cst_37 : f32 to vector<4x1xf32>
    %93 = arith.addf %89, %92 : vector<4x1xf32>
    %94 = math.rsqrt %93 : vector<4x1xf32>
    %95 = vector.broadcast %94 : vector<4x1xf32> to vector<4x32xf32>
    %96 = arith.mulf %91, %95 : vector<4x32xf32>
    %97 = vector.broadcast %77 : vector<1x32xf32> to vector<4x32xf32>
    %98 = arith.mulf %96, %97 : vector<4x32xf32>
    %99 = vector.broadcast %78 : vector<1x32xf32> to vector<4x32xf32>
    %100 = arith.addf %98, %99 : vector<4x32xf32>
    %c248 = arith.constant 248 : index
    %c0_38 = arith.constant 0 : index
    %101 = vector.load %arg1[%c248, %c0_38] : memref<432x128xf32, #tpu.memory_space<vmem>>, vector<32x64xf32>
    %cst_39 = arith.constant dense<0.000000e+00> : vector<4x64xf32>
    %102 = tpu.matmul %100, %101, %cst_39 {dimension_numbers = #tpu.dot_dimension_numbers<[1], [0], [0], [1], [0, 0, 1, 1], [], []>} : vector<4x32xf32>, vector<32x64xf32>, vector<4x64xf32> -> vector<4x64xf32>
    %c280 = arith.constant 280 : index
    %c0_40 = arith.constant 0 : index
    %103 = vector.load %arg1[%c280, %c0_40] : memref<432x128xf32, #tpu.memory_space<vmem>>, vector<1x64xf32>
    %104 = vector.broadcast %103 : vector<1x64xf32> to vector<4x64xf32>
    %105 = arith.addf %102, %104 : vector<4x64xf32>
    %cst_41 = arith.constant 0.000000e+00 : f32
    %106 = vector.broadcast %cst_41 : f32 to vector<4x64xf32>
    %107 = arith.maximumf %105, %106 : vector<4x64xf32>
    %c288 = arith.constant 288 : index
    %c0_42 = arith.constant 0 : index
    %108 = vector.load %arg1[%c288, %c0_42] : memref<432x128xf32, #tpu.memory_space<vmem>>, vector<64x32xf32>
    %cst_43 = arith.constant dense<0.000000e+00> : vector<4x32xf32>
    %109 = tpu.matmul %107, %108, %cst_43 {dimension_numbers = #tpu.dot_dimension_numbers<[1], [0], [0], [1], [0, 0, 1, 1], [], []>} : vector<4x64xf32>, vector<64x32xf32>, vector<4x32xf32> -> vector<4x32xf32>
    %c352 = arith.constant 352 : index
    %c0_44 = arith.constant 0 : index
    %110 = vector.load %arg1[%c352, %c0_44] : memref<432x128xf32, #tpu.memory_space<vmem>>, vector<1x32xf32>
    %111 = vector.broadcast %110 : vector<1x32xf32> to vector<4x32xf32>
    %112 = arith.addf %109, %111 : vector<4x32xf32>
    %113 = arith.addf %112, %100 : vector<4x32xf32>
    %c376 = arith.constant 376 : index
    %c0_45 = arith.constant 0 : index
    %114 = vector.load %arg1[%c376, %c0_45] : memref<432x128xf32, #tpu.memory_space<vmem>>, vector<1x32xf32>
    %c384 = arith.constant 384 : index
    %c0_46 = arith.constant 0 : index
    %115 = vector.load %arg1[%c384, %c0_46] : memref<432x128xf32, #tpu.memory_space<vmem>>, vector<1x32xf32>
    %cst_47 = arith.constant dense<0.000000e+00> : vector<4xf32>
    %116 = vector.multi_reduction <add>, %113, %cst_47 [1] : vector<4x32xf32> to vector<4xf32>
    %117 = vector.shape_cast %116 : vector<4xf32> to vector<4x1xf32>
    %cst_48 = arith.constant 3.200000e+01 : f32
    %118 = vector.broadcast %cst_48 : f32 to vector<4x1xf32>
    %119 = arith.divf %117, %118 : vector<4x1xf32>
    %120 = vector.broadcast %119 : vector<4x1xf32> to vector<4x32xf32>
    %121 = arith.subf %113, %120 : vector<4x32xf32>
    %122 = arith.mulf %121, %121 : vector<4x32xf32>
    %cst_49 = arith.constant dense<0.000000e+00> : vector<4xf32>
    %123 = vector.multi_reduction <add>, %122, %cst_49 [1] : vector<4x32xf32> to vector<4xf32>
    %124 = vector.shape_cast %123 : vector<4xf32> to vector<4x1xf32>
    %cst_50 = arith.constant 3.200000e+01 : f32
    %125 = vector.broadcast %cst_50 : f32 to vector<4x1xf32>
    %126 = arith.divf %124, %125 : vector<4x1xf32>
    %127 = vector.broadcast %119 : vector<4x1xf32> to vector<4x32xf32>
    %128 = arith.subf %113, %127 : vector<4x32xf32>
    %cst_51 = arith.constant 9.99999974E-6 : f32
    %129 = vector.broadcast %cst_51 : f32 to vector<4x1xf32>
    %130 = arith.addf %126, %129 : vector<4x1xf32>
    %131 = math.rsqrt %130 : vector<4x1xf32>
    %132 = vector.broadcast %131 : vector<4x1xf32> to vector<4x32xf32>
    %133 = arith.mulf %128, %132 : vector<4x32xf32>
    %134 = vector.broadcast %114 : vector<1x32xf32> to vector<4x32xf32>
    %135 = arith.mulf %133, %134 : vector<4x32xf32>
    %136 = vector.broadcast %115 : vector<1x32xf32> to vector<4x32xf32>
    %137 = arith.addf %135, %136 : vector<4x32xf32>
    %c392 = arith.constant 392 : index
    %c0_52 = arith.constant 0 : index
    %138 = vector.load %arg1[%c392, %c0_52] : memref<432x128xf32, #tpu.memory_space<vmem>>, vector<32x128xf32>
    %cst_53 = arith.constant dense<0.000000e+00> : vector<4x128xf32>
    %139 = tpu.matmul %137, %138, %cst_53 {dimension_numbers = #tpu.dot_dimension_numbers<[1], [0], [0], [1], [0, 0, 1, 1], [], []>} : vector<4x32xf32>, vector<32x128xf32>, vector<4x128xf32> -> vector<4x128xf32>
    %c424 = arith.constant 424 : index
    %c0_54 = arith.constant 0 : index
    %140 = vector.load %arg1[%c424, %c0_54] : memref<432x128xf32, #tpu.memory_space<vmem>>, vector<1x128xf32>
    %141 = vector.broadcast %140 : vector<1x128xf32> to vector<4x128xf32>
    %142 = arith.addf %139, %141 : vector<4x128xf32>
    %c0_55 = arith.constant 0 : index
    %c0_56 = arith.constant 0 : index
    %143 = vector.load %arg2[%c0_55, %c0_56] : memref<4x128xf32, #tpu.memory_space<vmem>>, vector<4x128xf32>
    tpu.vector_store %arg2[%c0_55, %c0_56], %142 {strides = array<i32>} : memref<4x128xf32, #tpu.memory_space<vmem>>, vector<4x128xf32>,
    return
  }
}

</mosaic_0001>

<llo_original>
// kernel: _lambda_.1
$region0: #{_lambda_.1}
  #allocation0 [shape = 'u32[]', space=smem, size = 0x4, offset = 0x4, fixed_abs, tag = 'smem constant byte address 0x4 - core index']
  #allocation1 [shape = 'u32[144,128]{1,0:T(1,128)}', space=vmem, size = 0x12000, scoped, tag = 'internal scratch']
  %s0 = inlined_call_operand.hbm [shape: f32[4,16], index: 0, kind: input, shape index: {}]
  %s1 = inlined_call_operand.hbm [shape: f32[432,128], index: 1, kind: input, shape index: {}]
  %s2 = inlined_call_operand.hbm [shape: f32[4,128], index: 2, kind: output, shape index: {}]
  %s3 = sld [smem:[#allocation0]]
  $region26: #{_lambda_.1} parent=0
    _
  %s5 = ssub.s32 1, %s3
  %s6 = scalar_select 0, %s5, %s3
  $region1: #{_lambda_.1} parent=0
    #allocation2 [shape = 'u8[2048]{0}', space=vmem, size = 0x800, scoped, tag = 'input window, operand 0, single buffered']
    #allocation3 [shape = 's32[1]{0}', space=sflag, size = 0x4, scoped, tag = 'scoped memory for _lambda_.1']
    #allocation4 [shape = 's32[1]{0}', space=sflag, size = 0x4, scoped, tag = 'scoped memory for _lambda_.1']
    #allocation5 [shape = 'u8[221184]{0}', space=vmem, size = 0x36000, scoped, tag = 'input window, operand 1, single buffered']
    #allocation6 [shape = 's32[1]{0}', space=sflag, size = 0x4, scoped, tag = 'scoped memory for _lambda_.1']
    #allocation7 [shape = 'u8[2048]{0}', space=vmem, size = 0x800, scoped, tag = 'output window, operand 0, single buffered']
    %7 = vsyncpa [#allocation3], 0
    %8 = vsyncpa [#allocation6], 0
    %9 = vsyncpa [#allocation4], 0
    // Predicated region
    $region2: #{_lambda_.1} parent=1 // pred_check
      _
    $region3: #{_lambda_.1} parent=1 // pred_check_branch
      %11 = sbr.rel (0) target = $region5
    $region4: #{_lambda_.1} parent=1 // pred_region
      %s13 = ssub.s32 64, 64
      %14 = vsyncadd [#allocation3], %s13
      %s16 = sshll.u32 [#allocation2], 4
      %s17 = int_to_ptr.vmem [resolvable:$true] %s16
      %19 = dma.hbm_to_vmem [thread:$0]  %s0, 64, %s17, [#allocation3]
    $region5: #{_lambda_.1} parent=1 // pred_fallthru
      _
    // Predicated region
    $region6: #{_lambda_.1} parent=1 // pred_check
      _
    $region7: #{_lambda_.1} parent=1 // pred_check_branch
      %21 = sbr.rel (0) target = $region9
    $region8: #{_lambda_.1} parent=1 // pred_region
      %s23 = ssub.s32 6912, 6912
      %24 = vsyncadd [#allocation6], %s23
      %s25 = sshll.u32 [#allocation5], 4
      %s26 = int_to_ptr.vmem [resolvable:$true] %s25
      %31 = dma.hbm_to_vmem [thread:$0]  %s1, 6912, %s26, [#allocation6], 128, 128, 8
    $region9: #{_lambda_.1} parent=1 // pred_fallthru
      _
    // Predicated region
    $region10: #{_lambda_.1} parent=1 // pred_check
      _
    $region11: #{_lambda_.1} parent=1 // pred_check_branch
      %33 = sbr.rel (0) target = $region13
    $region12: #{_lambda_.1} parent=1 // pred_region
      %34 = dma.done [#allocation3], 64
    $region13: #{_lambda_.1} parent=1 // pred_fallthru
      _
    // Predicated region
    $region14: #{_lambda_.1} parent=1 // pred_check
      _
    $region15: #{_lambda_.1} parent=1 // pred_check_branch
      %36 = sbr.rel (0) target = $region17
    $region16: #{_lambda_.1} parent=1 // pred_region
      %37 = dma.done [#allocation6], 6912
    $region17: #{_lambda_.1} parent=1 // pred_fallthru
      _
    %v38 = vld [vmem:[#allocation2] sm:$0xf]
    %v39 = vld [vmem:[#allocation5] sm:$0xff]
    %v40 = vld [vmem:[#allocation5 + $0x8] sm:$0xff]
    %v41 = vld [vmem:[#allocation5 + $0x10] sm:$0x1]
    %v42 = vlaneseq
    %v43 = vshrl.u32 %v42, 7
    %v44 = vsub.s32 0, %v43
    %v45 = vrot.slane %v41, %v44
    %vm46 = vcmask 130048
    %v48 = vsel %vm46, %v38, 0
    %50 = vmatprep.subr.mxu0 0.0
    %51 = vmatpush1.msra.mxu0 %v39
    %52 = vmatprep.subr.mxu0 0.0
    %53 = vmatpush1.msra.mxu0 %v40
    %54 = vmatprep.subr.mxu0 0.0
    %55 = vmatpush1.msra.mxu0 0.0
    %56 = vmatprep.subr.mxu0 0.0
    %57 = vmatpush1.msra.mxu0 0.0
    %58 = vmatprep.subr.mxu0 0.0
    %59 = vmatpush1.msra.mxu0 0.0
    %60 = vmatprep.subr.mxu0 0.0
    %61 = vmatpush1.msra.mxu0 0.0
    %62 = vmatprep.subr.mxu0 0.0
    %63 = vmatpush1.msra.mxu0 0.0
    %64 = vmatprep.subr.mxu0 0.0
    %65 = vmatpush1.msra.mxu0 0.0
    %66 = vmatprep.subr.mxu0 0.0
    %67 = vmatpush1.msra.mxu0 0.0
    %68 = vmatprep.subr.mxu0 0.0
    %69 = vmatpush1.msra.mxu0 0.0
    %70 = vmatprep.subr.mxu0 0.0
    %71 = vmatpush1.msra.mxu0 0.0
    %72 = vmatprep.subr.mxu0 0.0
    %73 = vmatpush1.msra.mxu0 0.0
    %74 = vmatprep.subr.mxu0 0.0
    %75 = vmatpush1.msra.mxu0 0.0
    %76 = vmatprep.subr.mxu0 0.0
    %77 = vmatpush1.msra.mxu0 0.0
    %78 = vmatprep.subr.mxu0 0.0
    %79 = vmatpush1.msra.mxu0 0.0
    %80 = vmatprep.subr.mxu0 0.0
    %81 = vmatpush1.msra.mxu0 0.0
    %82 = vmatprep.subr.mxu0 0.0
    %83 = vmatpush1.msra.mxu0 0.0
    %84 = vmatprep.subr.mxu0 0.0
    %85 = vmatpush1.msra.mxu0 0.0
    %86 = vmatprep.subr.mxu0 0.0
    %87 = vmatpush1.msra.mxu0 0.0
    %88 = vmatprep.subr.mxu0 0.0
    %89 = vmatpush1.msra.mxu0 0.0
    %90 = vmatprep.subr.mxu0 0.0
    %91 = vmatpush1.msra.mxu0 0.0
    %92 = vmatprep.subr.mxu0 0.0
    %93 = vmatpush1.msra.mxu0 0.0
    %94 = vmatprep.subr.mxu0 0.0
    %95 = vmatpush1.msra.mxu0 0.0
    %96 = vmatprep.subr.mxu0 0.0
    %97 = vmatpush1.msra.mxu0 0.0
    %98 = vmatprep.subr.mxu0 0.0
    %99 = vmatpush1.msra.mxu0 0.0
    %100 = vmatprep.subr.mxu0 0.0
    %101 = vmatpush1.msra.mxu0 0.0
    %102 = vmatprep.subr.mxu0 0.0
    %103 = vmatpush1.msra.mxu0 0.0
    %104 = vmatprep.subr.mxu0 0.0
    %105 = vmatpush1.msra.mxu0 0.0
    %106 = vmatprep.subr.mxu0 0.0
    %107 = vmatpush1.msra.mxu0 0.0
    %108 = vmatprep.subr.mxu0 0.0
    %109 = vmatpush1.msra.mxu0 0.0
    %110 = vmatprep.subr.mxu0 0.0
    %111 = vmatpush1.msra.mxu0 0.0
    %112 = vmatprep.subr.mxu0 0.0
    %113 = vmatpush1.msra.mxu0 0.0
    %114 = vmatprep.mubr.f32.mxu0 0.0
    %115 = vmatmul.mubr.f32.gmra.mrb[0].mxu0 %v48
    %v116 = vpop.f32.mrb[0].mxu0
    %v117 = vadd.f32 %v45, %v116
    %v118 = vpop.f32.mrb[0].mxu0
    %119 = vdwg.mxu0
    %v120 = vld [vmem:[#allocation5 + $0x18] sm:$0xff]
    %v121 = vld [vmem:[#allocation5 + $0x20] sm:$0xff]
    %v122 = vld [vmem:[#allocation5 + $0x28] sm:$0xff]
    %v123 = vld [vmem:[#allocation5 + $0x30] sm:$0xff]
    %v124 = vld [vmem:[#allocation5 + $0x38] sm:$0x1]
    %v125 = vlaneseq
    %v126 = vshrl.u32 %v125, 7
    %v127 = vsub.s32 0, %v126
    %v128 = vrot.slane %v124, %v127
    %vm129 = vcmask 261120
    %v131 = vsel %vm129, %v117, 0
    %133 = vmatprep.subr.mxu0 0.0
    %134 = vmatpush1.msra.mxu0 %v120
    %135 = vmatprep.subr.mxu0 0.0
    %136 = vmatpush1.msra.mxu0 %v121
    %137 = vmatprep.subr.mxu0 0.0
    %138 = vmatpush1.msra.mxu0 %v122
    %139 = vmatprep.subr.mxu0 0.0
    %140 = vmatpush1.msra.mxu0 %v123
    %141 = vmatprep.subr.mxu0 0.0
    %142 = vmatpush1.msra.mxu0 0.0
    %143 = vmatprep.subr.mxu0 0.0
    %144 = vmatpush1.msra.mxu0 0.0
    %145 = vmatprep.subr.mxu0 0.0
    %146 = vmatpush1.msra.mxu0 0.0
    %147 = vmatprep.subr.mxu0 0.0
    %148 = vmatpush1.msra.mxu0 0.0
    %149 = vmatprep.subr.mxu0 0.0
    %150 = vmatpush1.msra.mxu0 0.0
    %151 = vmatprep.subr.mxu0 0.0
    %152 = vmatpush1.msra.mxu0 0.0
    %153 = vmatprep.subr.mxu0 0.0
    %154 = vmatpush1.msra.mxu0 0.0
    %155 = vmatprep.subr.mxu0 0.0
    %156 = vmatpush1.msra.mxu0 0.0
    %157 = vmatprep.subr.mxu0 0.0
    %158 = vmatpush1.msra.mxu0 0.0
    %159 = vmatprep.subr.mxu0 0.0
    %160 = vmatpush1.msra.mxu0 0.0
    %161 = vmatprep.subr.mxu0 0.0
    %162 = vmatpush1.msra.mxu0 0.0
    %163 = vmatprep.subr.mxu0 0.0
    %164 = vmatpush1.msra.mxu0 0.0
    %165 = vmatprep.subr.mxu0 0.0
    %166 = vmatpush1.msra.mxu0 0.0
    %167 = vmatprep.subr.mxu0 0.0
    %168 = vmatpush1.msra.mxu0 0.0
    %169 = vmatprep.subr.mxu0 0.0
    %170 = vmatpush1.msra.mxu0 0.0
    %171 = vmatprep.subr.mxu0 0.0
    %172 = vmatpush1.msra.mxu0 0.0
    %173 = vmatprep.subr.mxu0 0.0
    %174 = vmatpush1.msra.mxu0 0.0
    %175 = vmatprep.subr.mxu0 0.0
    %176 = vmatpush1.msra.mxu0 0.0
    %177 = vmatprep.subr.mxu0 0.0
    %178 = vmatpush1.msra.mxu0 0.0
    %179 = vmatprep.subr.mxu0 0.0
    %180 = vmatpush1.msra.mxu0 0.0
    %181 = vmatprep.subr.mxu0 0.0
    %182 = vmatpush1.msra.mxu0 0.0
    %183 = vmatprep.subr.mxu0 0.0
    %184 = vmatpush1.msra.mxu0 0.0
    %185 = vmatprep.subr.mxu0 0.0
    %186 = vmatpush1.msra.mxu0 0.0
    %187 = vmatprep.subr.mxu0 0.0
    %188 = vmatpush1.msra.mxu0 0.0
    %189 = vmatprep.subr.mxu0 0.0
    %190 = vmatpush1.msra.mxu0 0.0
    %191 = vmatprep.subr.mxu0 0.0
    %192 = vmatpush1.msra.mxu0 0.0
    %193 = vmatprep.subr.mxu0 0.0
    %194 = vmatpush1.msra.mxu0 0.0
    %195 = vmatprep.subr.mxu0 0.0
    %196 = vmatpush1.msra.mxu0 0.0
    %197 = vmatprep.mubr.f32.mxu0 0.0
    %198 = vmatmul.mubr.f32.gmra.mrb[0].mxu0 %v131
    %v199 = vpop.f32.mrb[0].mxu0
    %v200 = vadd.f32 %v128, %v199
    %v201 = vpop.f32.mrb[0].mxu0
    %202 = vdwg.mxu0
    %v203 = vld [vmem:[#allocation5 + $0xb0] sm:$0x1]
    %v204 = vld [vmem:[#allocation5 + $0xb8] sm:$0x1]
    %vm205 = vcmask 257024
    %v206 = vsel %vm205, %v200, 0.0
    %207 = vadd.xlane.f32.xlu0 %v206
    %v208 = vpop.xlane.xlu0 %207
    %v209 = vrcp.pop 32.0
    %v210 = vmul.f32 %v208, %v209
    %v211 = vsub.f32 %v200, %v210
    %v212 = vmul.f32 %v211, %v211
    %v213 = vsel %vm205, %v212, 0.0
    %214 = vadd.xlane.f32.xlu0 %v213
    %v215 = vpop.xlane.xlu0 %214
    %v216 = vmul.f32 %v215, %v209
    %v217 = vadd.f32 %v216, 1e-05
    %v218 = vrsqrt.pop %v217
    %v219 = vmul.f32 %v211, %v218
    %v220 = vlaneseq
    %v221 = vshrl.u32 %v220, 7
    %v222 = vsub.s32 0, %v221
    %v223 = vrot.slane %v203, %v222
    %v224 = vmul.f32 %v219, %v223
    %v225 = vlaneseq
    %v226 = vshrl.u32 %v225, 7
    %v227 = vsub.s32 0, %v226
    %v228 = vrot.slane %v204, %v227
    %v229 = vadd.f32 %v224, %v228
    %v230 = vld [vmem:[#allocation5 + $0x40] sm:$0xff]
    %v231 = vld [vmem:[#allocation5 + $0x48] sm:$0xff]
    %v232 = vld [vmem:[#allocation5 + $0x50] sm:$0xff]
    %v233 = vld [vmem:[#allocation5 + $0x58] sm:$0xff]
    %v234 = vld [vmem:[#allocation5 + $0x60] sm:$0x1]
    %v235 = vlaneseq
    %v236 = vshrl.u32 %v235, 7
    %v237 = vsub.s32 0, %v236
    %v238 = vrot.slane %v234, %v237
    %v240 = vsel %vm129, %v229, 0
    %242 = vmatprep.subr.mxu0 0.0
    %243 = vmatpush1.msra.mxu0 %v230
    %244 = vmatprep.subr.mxu0 0.0
    %245 = vmatpush1.msra.mxu0 %v231
    %246 = vmatprep.subr.mxu0 0.0
    %247 = vmatpush1.msra.mxu0 %v232
    %248 = vmatprep.subr.mxu0 0.0
    %249 = vmatpush1.msra.mxu0 %v233
    %250 = vmatprep.subr.mxu0 0.0
    %251 = vmatpush1.msra.mxu0 0.0
    %252 = vmatprep.subr.mxu0 0.0
    %253 = vmatpush1.msra.mxu0 0.0
    %254 = vmatprep.subr.mxu0 0.0
    %255 = vmatpush1.msra.mxu0 0.0
    %256 = vmatprep.subr.mxu0 0.0
    %257 = vmatpush1.msra.mxu0 0.0
    %258 = vmatprep.subr.mxu0 0.0
    %259 = vmatpush1.msra.mxu0 0.0
    %260 = vmatprep.subr.mxu0 0.0
    %261 = vmatpush1.msra.mxu0 0.0
    %262 = vmatprep.subr.mxu0 0.0
    %263 = vmatpush1.msra.mxu0 0.0
    %264 = vmatprep.subr.mxu0 0.0
    %265 = vmatpush1.msra.mxu0 0.0
    %266 = vmatprep.subr.mxu0 0.0
    %267 = vmatpush1.msra.mxu0 0.0
    %268 = vmatprep.subr.mxu0 0.0
    %269 = vmatpush1.msra.mxu0 0.0
    %270 = vmatprep.subr.mxu0 0.0
    %271 = vmatpush1.msra.mxu0 0.0
    %272 = vmatprep.subr.mxu0 0.0
    %273 = vmatpush1.msra.mxu0 0.0
    %274 = vmatprep.subr.mxu0 0.0
    %275 = vmatpush1.msra.mxu0 0.0
    %276 = vmatprep.subr.mxu0 0.0
    %277 = vmatpush1.msra.mxu0 0.0
    %278 = vmatprep.subr.mxu0 0.0
    %279 = vmatpush1.msra.mxu0 0.0
    %280 = vmatprep.subr.mxu0 0.0
    %281 = vmatpush1.msra.mxu0 0.0
    %282 = vmatprep.subr.mxu0 0.0
    %283 = vmatpush1.msra.mxu0 0.0
    %284 = vmatprep.subr.mxu0 0.0
    %285 = vmatpush1.msra.mxu0 0.0
    %286 = vmatprep.subr.mxu0 0.0
    %287 = vmatpush1.msra.mxu0 0.0
    %288 = vmatprep.subr.mxu0 0.0
    %289 = vmatpush1.msra.mxu0 0.0
    %290 = vmatprep.subr.mxu0 0.0
    %291 = vmatpush1.msra.mxu0 0.0
    %292 = vmatprep.subr.mxu0 0.0
    %293 = vmatpush1.msra.mxu0 0.0
    %294 = vmatprep.subr.mxu0 0.0
    %295 = vmatpush1.msra.mxu0 0.0
    %296 = vmatprep.subr.mxu0 0.0
    %297 = vmatpush1.msra.mxu0 0.0
    %298 = vmatprep.subr.mxu0 0.0
    %299 = vmatpush1.msra.mxu0 0.0
    %300 = vmatprep.subr.mxu0 0.0
    %301 = vmatpush1.msra.mxu0 0.0
    %302 = vmatprep.subr.mxu0 0.0
    %303 = vmatpush1.msra.mxu0 0.0
    %304 = vmatprep.subr.mxu0 0.0
    %305 = vmatpush1.msra.mxu0 0.0
    %306 = vmatprep.mubr.f32.mxu0 0.0
    %307 = vmatmul.mubr.f32.gmra.mrb[0].mxu0 %v240
    %v308 = vpop.f32.mrb[0].mxu0
    %v309 = vadd.f32 %v238, %v308
    %v310 = vpop.f32.mrb[0].mxu0
    %311 = vdwg.mxu0
    %v312 = vmax.f32 %v309, 0.0
    %v313 = vld [vmem:[#allocation5 + $0x68] sm:$0xff]
    %v314 = vld [vmem:[#allocation5 + $0x70] sm:$0xff]
    %v315 = vld [vmem:[#allocation5 + $0x78] sm:$0xff]
    %v316 = vld [vmem:[#allocation5 + $0x80] sm:$0xff]
    %v317 = vld [vmem:[#allocation5 + $0x88] sm:$0xff]
    %v318 = vld [vmem:[#allocation5 + $0x90] sm:$0xff]
    %v319 = vld [vmem:[#allocation5 + $0x98] sm:$0xff]
    %v320 = vld [vmem:[#allocation5 + $0xa0] sm:$0xff]
    %v321 = vld [vmem:[#allocation5 + $0xa8] sm:$0x1]
    %v322 = vlaneseq
    %v323 = vshrl.u32 %v322, 7
    %v324 = vsub.s32 0, %v323
    %v325 = vrot.slane %v321, %v324
    %vm326 = vcmask 523264
    %v328 = vsel %vm326, %v312, 0
    %330 = vmatprep.subr.mxu0 0.0
    %331 = vmatpush1.msra.mxu0 %v313
    %332 = vmatprep.subr.mxu0 0.0
    %333 = vmatpush1.msra.mxu0 %v314
    %334 = vmatprep.subr.mxu0 0.0
    %335 = vmatpush1.msra.mxu0 %v315
    %336 = vmatprep.subr.mxu0 0.0
    %337 = vmatpush1.msra.mxu0 %v316
    %338 = vmatprep.subr.mxu0 0.0
    %339 = vmatpush1.msra.mxu0 %v317
    %340 = vmatprep.subr.mxu0 0.0
    %341 = vmatpush1.msra.mxu0 %v318
    %342 = vmatprep.subr.mxu0 0.0
    %343 = vmatpush1.msra.mxu0 %v319
    %344 = vmatprep.subr.mxu0 0.0
    %345 = vmatpush1.msra.mxu0 %v320
    %346 = vmatprep.subr.mxu0 0.0
    %347 = vmatpush1.msra.mxu0 0.0
    %348 = vmatprep.subr.mxu0 0.0
    %349 = vmatpush1.msra.mxu0 0.0
    %350 = vmatprep.subr.mxu0 0.0
    %351 = vmatpush1.msra.mxu0 0.0
    %352 = vmatprep.subr.mxu0 0.0
    %353 = vmatpush1.msra.mxu0 0.0
    %354 = vmatprep.subr.mxu0 0.0
    %355 = vmatpush1.msra.mxu0 0.0
    %356 = vmatprep.subr.mxu0 0.0
    %357 = vmatpush1.msra.mxu0 0.0
    %358 = vmatprep.subr.mxu0 0.0
    %359 = vmatpush1.msra.mxu0 0.0
    %360 = vmatprep.subr.mxu0 0.0
    %361 = vmatpush1.msra.mxu0 0.0
    %362 = vmatprep.subr.mxu0 0.0
    %363 = vmatpush1.msra.mxu0 0.0
    %364 = vmatprep.subr.mxu0 0.0
    %365 = vmatpush1.msra.mxu0 0.0
    %366 = vmatprep.subr.mxu0 0.0
    %367 = vmatpush1.msra.mxu0 0.0
    %368 = vmatprep.subr.mxu0 0.0
    %369 = vmatpush1.msra.mxu0 0.0
    %370 = vmatprep.subr.mxu0 0.0
    %371 = vmatpush1.msra.mxu0 0.0
    %372 = vmatprep.subr.mxu0 0.0
    %373 = vmatpush1.msra.mxu0 0.0
    %374 = vmatprep.subr.mxu0 0.0
    %375 = vmatpush1.msra.mxu0 0.0
    %376 = vmatprep.subr.mxu0 0.0
    %377 = vmatpush1.msra.mxu0 0.0
    %378 = vmatprep.subr.mxu0 0.0
    %379 = vmatpush1.msra.mxu0 0.0
    %380 = vmatprep.subr.mxu0 0.0
    %381 = vmatpush1.msra.mxu0 0.0
    %382 = vmatprep.subr.mxu0 0.0
    %383 = vmatpush1.msra.mxu0 0.0
    %384 = vmatprep.subr.mxu0 0.0
    %385 = vmatpush1.msra.mxu0 0.0
    %386 = vmatprep.subr.mxu0 0.0
    %387 = vmatpush1.msra.mxu0 0.0
    %388 = vmatprep.subr.mxu0 0.0
    %389 = vmatpush1.msra.mxu0 0.0
    %390 = vmatprep.subr.mxu0 0.0
    %391 = vmatpush1.msra.mxu0 0.0
    %392 = vmatprep.subr.mxu0 0.0
    %393 = vmatpush1.msra.mxu0 0.0
    %394 = vmatprep.mubr.f32.mxu0 0.0
    %395 = vmatmul.mubr.f32.gmra.mrb[0].mxu0 %v328
    %v396 = vpop.f32.mrb[0].mxu0
    %v397 = vadd.f32 %v325, %v396
    %v398 = vpop.f32.mrb[0].mxu0
    %399 = vdwg.mxu0
    %v400 = vadd.f32 %v397, %v229
    %v401 = vld [vmem:[#allocation5 + $0xc0] sm:$0x1]
    %v402 = vld [vmem:[#allocation5 + $0xc8] sm:$0x1]
    %v403 = vsel %vm205, %v400, 0.0
    %404 = vadd.xlane.f32.xlu0 %v403
    %v405 = vpop.xlane.xlu0 %404
    %v406 = vmul.f32 %v405, %v209
    %v407 = vsub.f32 %v400, %v406
    %v408 = vmul.f32 %v407, %v407
    %v409 = vsel %vm205, %v408, 0.0
    %410 = vadd.xlane.f32.xlu0 %v409
    %v411 = vpop.xlane.xlu0 %410
    %v412 = vmul.f32 %v411, %v209
    %v413 = vadd.f32 %v412, 1e-05
    %v414 = vrsqrt.pop %v413
    %v415 = vmul.f32 %v407, %v414
    %v416 = vlaneseq
    %v417 = vshrl.u32 %v416, 7
    %v418 = vsub.s32 0, %v417
    %v419 = vrot.slane %v401, %v418
    %v420 = vmul.f32 %v415, %v419
    %v421 = vlaneseq
    %v422 = vshrl.u32 %v421, 7
    %v423 = vsub.s32 0, %v422
    %v424 = vrot.slane %v402, %v423
    %v425 = vadd.f32 %v420, %v424
    %v426 = vld [vmem:[#allocation5 + $0xd0] sm:$0xff]
    %v427 = vld [vmem:[#allocation5 + $0xd8] sm:$0xff]
    %v428 = vld [vmem:[#allocation5 + $0xe0] sm:$0xff]
    %v429 = vld [vmem:[#allocation5 + $0xe8] sm:$0xff]
    %v430 = vld [vmem:[#allocation5 + $0xf0] sm:$0x1]
    %v431 = vlaneseq
    %v432 = vshrl.u32 %v431, 7
    %v433 = vsub.s32 0, %v432
    %v434 = vrot.slane %v430, %v433
    %v436 = vsel %vm129, %v425, 0
    %438 = vmatprep.subr.mxu0 0.0
    %439 = vmatpush1.msra.mxu0 %v426
    %440 = vmatprep.subr.mxu0 0.0
    %441 = vmatpush1.msra.mxu0 %v427
    %442 = vmatprep.subr.mxu0 0.0
    %443 = vmatpush1.msra.mxu0 %v428
    %444 = vmatprep.subr.mxu0 0.0
    %445 = vmatpush1.msra.mxu0 %v429
    %446 = vmatprep.subr.mxu0 0.0
    %447 = vmatpush1.msra.mxu0 0.0
    %448 = vmatprep.subr.mxu0 0.0
    %449 = vmatpush1.msra.mxu0 0.0
    %450 = vmatprep.subr.mxu0 0.0
    %451 = vmatpush1.msra.mxu0 0.0
    %452 = vmatprep.subr.mxu0 0.0
    %453 = vmatpush1.msra.mxu0 0.0
    %454 = vmatprep.subr.mxu0 0.0
    %455 = vmatpush1.msra.mxu0 0.0
    %456 = vmatprep.subr.mxu0 0.0
    %457 = vmatpush1.msra.mxu0 0.0
    %458 = vmatprep.subr.mxu0 0.0
    %459 = vmatpush1.msra.mxu0 0.0
    %460 = vmatprep.subr.mxu0 0.0
    %461 = vmatpush1.msra.mxu0 0.0
    %462 = vmatprep.subr.mxu0 0.0
    %463 = vmatpush1.msra.mxu0 0.0
    %464 = vmatprep.subr.mxu0 0.0
    %465 = vmatpush1.msra.mxu0 0.0
    %466 = vmatprep.subr.mxu0 0.0
    %467 = vmatpush1.msra.mxu0 0.0
    %468 = vmatprep.subr.mxu0 0.0
    %469 = vmatpush1.msra.mxu0 0.0
    %470 = vmatprep.subr.mxu0 0.0
    %471 = vmatpush1.msra.mxu0 0.0
    %472 = vmatprep.subr.mxu0 0.0
    %473 = vmatpush1.msra.mxu0 0.0
    %474 = vmatprep.subr.mxu0 0.0
    %475 = vmatpush1.msra.mxu0 0.0
    %476 = vmatprep.subr.mxu0 0.0
    %477 = vmatpush1.msra.mxu0 0.0
    %478 = vmatprep.subr.mxu0 0.0
    %479 = vmatpush1.msra.mxu0 0.0
    %480 = vmatprep.subr.mxu0 0.0
    %481 = vmatpush1.msra.mxu0 0.0
    %482 = vmatprep.subr.mxu0 0.0
    %483 = vmatpush1.msra.mxu0 0.0
    %484 = vmatprep.subr.mxu0 0.0
    %485 = vmatpush1.msra.mxu0 0.0
    %486 = vmatprep.subr.mxu0 0.0
    %487 = vmatpush1.msra.mxu0 0.0
    %488 = vmatprep.subr.mxu0 0.0
    %489 = vmatpush1.msra.mxu0 0.0
    %490 = vmatprep.subr.mxu0 0.0
    %491 = vmatpush1.msra.mxu0 0.0
    %492 = vmatprep.subr.mxu0 0.0
    %493 = vmatpush1.msra.mxu0 0.0
    %494 = vmatprep.subr.mxu0 0.0
    %495 = vmatpush1.msra.mxu0 0.0
    %496 = vmatprep.subr.mxu0 0.0
    %497 = vmatpush1.msra.mxu0 0.0
    %498 = vmatprep.subr.mxu0 0.0
    %499 = vmatpush1.msra.mxu0 0.0
    %500 = vmatprep.subr.mxu0 0.0
    %501 = vmatpush1.msra.mxu0 0.0
    %502 = vmatprep.mubr.f32.mxu0 0.0
    %503 = vmatmul.mubr.f32.gmra.mrb[0].mxu0 %v436
    %v504 = vpop.f32.mrb[0].mxu0
    %v505 = vadd.f32 %v434, %v504
    %v506 = vpop.f32.mrb[0].mxu0
    %507 = vdwg.mxu0
    %v508 = vld [vmem:[#allocation5 + $0x168] sm:$0x1]
    %v509 = vld [vmem:[#allocation5 + $0x170] sm:$0x1]
    %v510 = vsel %vm205, %v505, 0.0
    %511 = vadd.xlane.f32.xlu0 %v510
    %v512 = vpop.xlane.xlu0 %511
    %v513 = vmul.f32 %v512, %v209
    %v514 = vsub.f32 %v505, %v513
    %v515 = vmul.f32 %v514, %v514
    %v516 = vsel %vm205, %v515, 0.0
    %517 = vadd.xlane.f32.xlu0 %v516
    %v518 = vpop.xlane.xlu0 %517
    %v519 = vmul.f32 %v518, %v209
    %v520 = vadd.f32 %v519, 1e-05
    %v521 = vrsqrt.pop %v520
    %v522 = vmul.f32 %v514, %v521
    %v523 = vlaneseq
    %v524 = vshrl.u32 %v523, 7
    %v525 = vsub.s32 0, %v524
    %v526 = vrot.slane %v508, %v525
    %v527 = vmul.f32 %v522, %v526
    %v528 = vlaneseq
    %v529 = vshrl.u32 %v528, 7
    %v530 = vsub.s32 0, %v529
    %v531 = vrot.slane %v509, %v530
    %v532 = vadd.f32 %v527, %v531
    %v533 = vld [vmem:[#allocation5 + $0xf8] sm:$0xff]
    %v534 = vld [vmem:[#allocation5 + $0x100] sm:$0xff]
    %v535 = vld [vmem:[#allocation5 + $0x108] sm:$0xff]
    %v536 = vld [vmem:[#allocation5 + $0x110] sm:$0xff]
    %v537 = vld [vmem:[#allocation5 + $0x118] sm:$0x1]
    %v538 = vlaneseq
    %v539 = vshrl.u32 %v538, 7
    %v540 = vsub.s32 0, %v539
    %v541 = vrot.slane %v537, %v540
    %v543 = vsel %vm129, %v532, 0
    %545 = vmatprep.subr.mxu0 0.0
    %546 = vmatpush1.msra.mxu0 %v533
    %547 = vmatprep.subr.mxu0 0.0
    %548 = vmatpush1.msra.mxu0 %v534
    %549 = vmatprep.subr.mxu0 0.0
    %550 = vmatpush1.msra.mxu0 %v535
    %551 = vmatprep.subr.mxu0 0.0
    %552 = vmatpush1.msra.mxu0 %v536
    %553 = vmatprep.subr.mxu0 0.0
    %554 = vmatpush1.msra.mxu0 0.0
    %555 = vmatprep.subr.mxu0 0.0
    %556 = vmatpush1.msra.mxu0 0.0
    %557 = vmatprep.subr.mxu0 0.0
    %558 = vmatpush1.msra.mxu0 0.0
    %559 = vmatprep.subr.mxu0 0.0
    %560 = vmatpush1.msra.mxu0 0.0
    %561 = vmatprep.subr.mxu0 0.0
    %562 = vmatpush1.msra.mxu0 0.0
    %563 = vmatprep.subr.mxu0 0.0
    %564 = vmatpush1.msra.mxu0 0.0
    %565 = vmatprep.subr.mxu0 0.0
    %566 = vmatpush1.msra.mxu0 0.0
    %567 = vmatprep.subr.mxu0 0.0
    %568 = vmatpush1.msra.mxu0 0.0
    %569 = vmatprep.subr.mxu0 0.0
    %570 = vmatpush1.msra.mxu0 0.0
    %571 = vmatprep.subr.mxu0 0.0
    %572 = vmatpush1.msra.mxu0 0.0
    %573 = vmatprep.subr.mxu0 0.0
    %574 = vmatpush1.msra.mxu0 0.0
    %575 = vmatprep.subr.mxu0 0.0
    %576 = vmatpush1.msra.mxu0 0.0
    %577 = vmatprep.subr.mxu0 0.0
    %578 = vmatpush1.msra.mxu0 0.0
    %579 = vmatprep.subr.mxu0 0.0
    %580 = vmatpush1.msra.mxu0 0.0
    %581 = vmatprep.subr.mxu0 0.0
    %582 = vmatpush1.msra.mxu0 0.0
    %583 = vmatprep.subr.mxu0 0.0
    %584 = vmatpush1.msra.mxu0 0.0
    %585 = vmatprep.subr.mxu0 0.0
    %586 = vmatpush1.msra.mxu0 0.0
    %587 = vmatprep.subr.mxu0 0.0
    %588 = vmatpush1.msra.mxu0 0.0
    %589 = vmatprep.subr.mxu0 0.0
    %590 = vmatpush1.msra.mxu0 0.0
    %591 = vmatprep.subr.mxu0 0.0
    %592 = vmatpush1.msra.mxu0 0.0
    %593 = vmatprep.subr.mxu0 0.0
    %594 = vmatpush1.msra.mxu0 0.0
    %595 = vmatprep.subr.mxu0 0.0
    %596 = vmatpush1.msra.mxu0 0.0
    %597 = vmatprep.subr.mxu0 0.0
    %598 = vmatpush1.msra.mxu0 0.0
    %599 = vmatprep.subr.mxu0 0.0
    %600 = vmatpush1.msra.mxu0 0.0
    %601 = vmatprep.subr.mxu0 0.0
    %602 = vmatpush1.msra.mxu0 0.0
    %603 = vmatprep.subr.mxu0 0.0
    %604 = vmatpush1.msra.mxu0 0.0
    %605 = vmatprep.subr.mxu0 0.0
    %606 = vmatpush1.msra.mxu0 0.0
    %607 = vmatprep.subr.mxu0 0.0
    %608 = vmatpush1.msra.mxu0 0.0
    %609 = vmatprep.mubr.f32.mxu0 0.0
    %610 = vmatmul.mubr.f32.gmra.mrb[0].mxu0 %v543
    %v611 = vpop.f32.mrb[0].mxu0
    %v612 = vadd.f32 %v541, %v611
    %v613 = vpop.f32.mrb[0].mxu0
    %614 = vdwg.mxu0
    %v615 = vmax.f32 %v612, 0.0
    %v616 = vld [vmem:[#allocation5 + $0x120] sm:$0xff]
    %v617 = vld [vmem:[#allocation5 + $0x128] sm:$0xff]
    %v618 = vld [vmem:[#allocation5 + $0x130] sm:$0xff]
    %v619 = vld [vmem:[#allocation5 + $0x138] sm:$0xff]
    %v620 = vld [vmem:[#allocation5 + $0x140] sm:$0xff]
    %v621 = vld [vmem:[#allocation5 + $0x148] sm:$0xff]
    %v622 = vld [vmem:[#allocation5 + $0x150] sm:$0xff]
    %v623 = vld [vmem:[#allocation5 + $0x158] sm:$0xff]
    %v624 = vld [vmem:[#allocation5 + $0x160] sm:$0x1]
    %v625 = vlaneseq
    %v626 = vshrl.u32 %v625, 7
    %v627 = vsub.s32 0, %v626
    %v628 = vrot.slane %v624, %v627
    %v630 = vsel %vm326, %v615, 0
    %632 = vmatprep.subr.mxu0 0.0
    %633 = vmatpush1.msra.mxu0 %v616
    %634 = vmatprep.subr.mxu0 0.0
    %635 = vmatpush1.msra.mxu0 %v617
    %636 = vmatprep.subr.mxu0 0.0
    %637 = vmatpush1.msra.mxu0 %v618
    %638 = vmatprep.subr.mxu0 0.0
    %639 = vmatpush1.msra.mxu0 %v619
    %640 = vmatprep.subr.mxu0 0.0
    %641 = vmatpush1.msra.mxu0 %v620
    %642 = vmatprep.subr.mxu0 0.0
    %643 = vmatpush1.msra.mxu0 %v621
    %644 = vmatprep.subr.mxu0 0.0
    %645 = vmatpush1.msra.mxu0 %v622
    %646 = vmatprep.subr.mxu0 0.0
    %647 = vmatpush1.msra.mxu0 %v623
    %648 = vmatprep.subr.mxu0 0.0
    %649 = vmatpush1.msra.mxu0 0.0
    %650 = vmatprep.subr.mxu0 0.0
    %651 = vmatpush1.msra.mxu0 0.0
    %652 = vmatprep.subr.mxu0 0.0
    %653 = vmatpush1.msra.mxu0 0.0
    %654 = vmatprep.subr.mxu0 0.0
    %655 = vmatpush1.msra.mxu0 0.0
    %656 = vmatprep.subr.mxu0 0.0
    %657 = vmatpush1.msra.mxu0 0.0
    %658 = vmatprep.subr.mxu0 0.0
    %659 = vmatpush1.msra.mxu0 0.0
    %660 = vmatprep.subr.mxu0 0.0
    %661 = vmatpush1.msra.mxu0 0.0
    %662 = vmatprep.subr.mxu0 0.0
    %663 = vmatpush1.msra.mxu0 0.0
    %664 = vmatprep.subr.mxu0 0.0
    %665 = vmatpush1.msra.mxu0 0.0
    %666 = vmatprep.subr.mxu0 0.0
    %667 = vmatpush1.msra.mxu0 0.0
    %668 = vmatprep.subr.mxu0 0.0
    %669 = vmatpush1.msra.mxu0 0.0
    %670 = vmatprep.subr.mxu0 0.0
    %671 = vmatpush1.msra.mxu0 0.0
    %672 = vmatprep.subr.mxu0 0.0
    %673 = vmatpush1.msra.mxu0 0.0
    %674 = vmatprep.subr.mxu0 0.0
    %675 = vmatpush1.msra.mxu0 0.0
    %676 = vmatprep.subr.mxu0 0.0
    %677 = vmatpush1.msra.mxu0 0.0
    %678 = vmatprep.subr.mxu0 0.0
    %679 = vmatpush1.msra.mxu0 0.0
    %680 = vmatprep.subr.mxu0 0.0
    %681 = vmatpush1.msra.mxu0 0.0
    %682 = vmatprep.subr.mxu0 0.0
    %683 = vmatpush1.msra.mxu0 0.0
    %684 = vmatprep.subr.mxu0 0.0
    %685 = vmatpush1.msra.mxu0 0.0
    %686 = vmatprep.subr.mxu0 0.0
    %687 = vmatpush1.msra.mxu0 0.0
    %688 = vmatprep.subr.mxu0 0.0
    %689 = vmatpush1.msra.mxu0 0.0
    %690 = vmatprep.subr.mxu0 0.0
    %691 = vmatpush1.msra.mxu0 0.0
    %692 = vmatprep.subr.mxu0 0.0
    %693 = vmatpush1.msra.mxu0 0.0
    %694 = vmatprep.subr.mxu0 0.0
    %695 = vmatpush1.msra.mxu0 0.0
    %696 = vmatprep.mubr.f32.mxu0 0.0
    %697 = vmatmul.mubr.f32.gmra.mrb[0].mxu0 %v630
    %v698 = vpop.f32.mrb[0].mxu0
    %v699 = vadd.f32 %v628, %v698
    %v700 = vpop.f32.mrb[0].mxu0
    %701 = vdwg.mxu0
    %v702 = vadd.f32 %v699, %v532
    %v703 = vld [vmem:[#allocation5 + $0x178] sm:$0x1]
    %v704 = vld [vmem:[#allocation5 + $0x180] sm:$0x1]
    %v705 = vsel %vm205, %v702, 0.0
    %706 = vadd.xlane.f32.xlu0 %v705
    %v707 = vpop.xlane.xlu0 %706
    %v708 = vmul.f32 %v707, %v209
    %v709 = vsub.f32 %v702, %v708
    %v710 = vmul.f32 %v709, %v709
    %v711 = vsel %vm205, %v710, 0.0
    %712 = vadd.xlane.f32.xlu0 %v711
    %v713 = vpop.xlane.xlu0 %712
    %v714 = vmul.f32 %v713, %v209
    %v715 = vadd.f32 %v714, 1e-05
    %v716 = vrsqrt.pop %v715
    %v717 = vmul.f32 %v709, %v716
    %v718 = vlaneseq
    %v719 = vshrl.u32 %v718, 7
    %v720 = vsub.s32 0, %v719
    %v721 = vrot.slane %v703, %v720
    %v722 = vmul.f32 %v717, %v721
    %v723 = vlaneseq
    %v724 = vshrl.u32 %v723, 7
    %v725 = vsub.s32 0, %v724
    %v726 = vrot.slane %v704, %v725
    %v727 = vadd.f32 %v722, %v726
    %v728 = vld [vmem:[#allocation5 + $0x188] sm:$0xff]
    %v729 = vld [vmem:[#allocation5 + $0x190] sm:$0xff]
    %v730 = vld [vmem:[#allocation5 + $0x198] sm:$0xff]
    %v731 = vld [vmem:[#allocation5 + $0x1a0] sm:$0xff]
    %v732 = vld [vmem:[#allocation5 + $0x1a8] sm:$0x1]
    %v733 = vlaneseq
    %v734 = vshrl.u32 %v733, 7
    %v735 = vsub.s32 0, %v734
    %v736 = vrot.slane %v732, %v735
    %v738 = vsel %vm129, %v727, 0
    %740 = vmatprep.subr.mxu0 0.0
    %741 = vmatpush1.msra.mxu0 %v728
    %742 = vmatprep.subr.mxu0 0.0
    %743 = vmatpush1.msra.mxu0 %v729
    %744 = vmatprep.subr.mxu0 0.0
    %745 = vmatpush1.msra.mxu0 %v730
    %746 = vmatprep.subr.mxu0 0.0
    %747 = vmatpush1.msra.mxu0 %v731
    %748 = vmatprep.subr.mxu0 0.0
    %749 = vmatpush1.msra.mxu0 0.0
    %750 = vmatprep.subr.mxu0 0.0
    %751 = vmatpush1.msra.mxu0 0.0
    %752 = vmatprep.subr.mxu0 0.0
    %753 = vmatpush1.msra.mxu0 0.0
    %754 = vmatprep.subr.mxu0 0.0
    %755 = vmatpush1.msra.mxu0 0.0
    %756 = vmatprep.subr.mxu0 0.0
    %757 = vmatpush1.msra.mxu0 0.0
    %758 = vmatprep.subr.mxu0 0.0
    %759 = vmatpush1.msra.mxu0 0.0
    %760 = vmatprep.subr.mxu0 0.0
    %761 = vmatpush1.msra.mxu0 0.0
    %762 = vmatprep.subr.mxu0 0.0
    %763 = vmatpush1.msra.mxu0 0.0
    %764 = vmatprep.subr.mxu0 0.0
    %765 = vmatpush1.msra.mxu0 0.0
    %766 = vmatprep.subr.mxu0 0.0
    %767 = vmatpush1.msra.mxu0 0.0
    %768 = vmatprep.subr.mxu0 0.0
    %769 = vmatpush1.msra.mxu0 0.0
    %770 = vmatprep.subr.mxu0 0.0
    %771 = vmatpush1.msra.mxu0 0.0
    %772 = vmatprep.subr.mxu0 0.0
    %773 = vmatpush1.msra.mxu0 0.0
    %774 = vmatprep.subr.mxu0 0.0
    %775 = vmatpush1.msra.mxu0 0.0
    %776 = vmatprep.subr.mxu0 0.0
    %777 = vmatpush1.msra.mxu0 0.0
    %778 = vmatprep.subr.mxu0 0.0
    %779 = vmatpush1.msra.mxu0 0.0
    %780 = vmatprep.subr.mxu0 0.0
    %781 = vmatpush1.msra.mxu0 0.0
    %782 = vmatprep.subr.mxu0 0.0
    %783 = vmatpush1.msra.mxu0 0.0
    %784 = vmatprep.subr.mxu0 0.0
    %785 = vmatpush1.msra.mxu0 0.0
    %786 = vmatprep.subr.mxu0 0.0
    %787 = vmatpush1.msra.mxu0 0.0
    %788 = vmatprep.subr.mxu0 0.0
    %789 = vmatpush1.msra.mxu0 0.0
    %790 = vmatprep.subr.mxu0 0.0
    %791 = vmatpush1.msra.mxu0 0.0
    %792 = vmatprep.subr.mxu0 0.0
    %793 = vmatpush1.msra.mxu0 0.0
    %794 = vmatprep.subr.mxu0 0.0
    %795 = vmatpush1.msra.mxu0 0.0
    %796 = vmatprep.subr.mxu0 0.0
    %797 = vmatpush1.msra.mxu0 0.0
    %798 = vmatprep.subr.mxu0 0.0
    %799 = vmatpush1.msra.mxu0 0.0
    %800 = vmatprep.subr.mxu0 0.0
    %801 = vmatpush1.msra.mxu0 0.0
    %802 = vmatprep.subr.mxu0 0.0
    %803 = vmatpush1.msra.mxu0 0.0
    %804 = vmatprep.mubr.f32.mxu0 0.0
    %805 = vmatmul.mubr.f32.gmra.mrb[0].mxu0 %v738
    %v806 = vpop.f32.mrb[0].mxu0
    %v807 = vadd.f32 %v736, %v806
    %v808 = vpop.f32.mrb[0].mxu0
    %809 = vdwg.mxu0
    %810 = vst [vmem:[#allocation7] sm:$0xf] %v807
    // Predicated region
    $region18: #{_lambda_.1} parent=1 // pred_check
      _
    $region19: #{_lambda_.1} parent=1 // pred_check_branch
      %812 = sbr.rel (0) target = $region21
    $region20: #{_lambda_.1} parent=1 // pred_region
      %s814 = ssub.s32 64, 64
      %815 = vsyncadd [#allocation4], %s814
      %s817 = sshll.u32 [#allocation7], 4
      %s818 = int_to_ptr.vmem [resolvable:$true] %s817
      %820 = dma.vmem_to_hbm [thread:$0]  %s818, 64, %s2, [#allocation4]
    $region21: #{_lambda_.1} parent=1 // pred_fallthru
      _
    // Predicated region
    $region22: #{_lambda_.1} parent=1 // pred_check
      _
    $region23: #{_lambda_.1} parent=1 // pred_check_branch
      %822 = sbr.rel (0) target = $region25
    $region24: #{_lambda_.1} parent=1 // pred_region
      %823 = dma.done [#allocation4], 64
    $region25: #{_lambda_.1} parent=1 // pred_fallthru
      _
    %824 = vsyncpa [#allocation3], 1
    %825 = vsyncpa [#allocation6], 1
    %826 = vsyncpa [#allocation4], 1

</llo_original>
